<compile_context>
chip_gen: v5e
topology: v5e:2x2
jax: 0.10.0
libtpu: 0.0.40
codegen_flags: <defaults>
</compile_context>

<pallas_src>
import jax
import jax.numpy as jnp
from jax.experimental import pallas as pl
from jax.experimental.pallas import tpu as pltpu


def _layernorm_nd_kernel(eps, inv_l):
    def kernel(x_ref, w_ref, b_ref, o_ref):
        # x_ref / o_ref: (C_BLK, L)    w_ref / b_ref: (C_BLK, 1) f32
        x = x_ref[...].astype(jnp.float32)

        # Two-pass statistics (matches the PyTorch forward; no E[x^2]-E[x]^2
        # cancellation for large-mean inputs).  x is VMEM-resident so the second
        # sweep is free at HBM-bound speeds.
        mean = jnp.sum(x, axis=-1, keepdims=True) * inv_l          # (C_BLK, 1)
        xc = x - mean
        var = jnp.sum(xc * xc, axis=-1, keepdims=True) * inv_l     # biased variance
        inv_std = jax.lax.rsqrt(var + eps)                         # EUP rsqrt

        scale = w_ref[...] * inv_std                               # (C_BLK, 1)
        o_ref[...] = (xc * scale + b_ref[...]).astype(o_ref.dtype)

    return kernel


def _vmem_capacity_bytes():
    try:
        cap = int(getattr(pltpu.get_tpu_info(), "vmem_capacity_bytes", 0))
        if cap > 0:
            return cap
    except Exception:
        pass
    return 64 * 1024 * 1024  # conservative fallback (v7x per-TC size)


def _choose_c_block(C, L, itemsize, budget_bytes):
    """Channel-tile rows: largest dtype-aware sublane multiple whose estimated VMEM
    working set (double-buffered in+out in the HBM dtype + ~3 f32 temporaries) fits in
    budget_bytes.  Need not divide C — the last grid block may be partial."""
    sub = max(8, 32 // itemsize)              # 8 f32, 16 bf16, 32 int8/fp8
    per_elem = 4 * itemsize + 3 * 4           # 2x(in+out) buffers + f32 temporaries
    rows = budget_bytes // max(1, L * per_elem)
    rows = (rows // sub) * sub
    if rows <= 0:
        rows = sub
    return C if rows >= C else int(rows)


def layernorm_nd(x, weight, bias, eps=1e-12, c_block=None):
    """Pallas TPU implementation of LayerNormND.forward.

    x: (B, C, *spatial); weight/bias: (C,).
    `c_block` optionally overrides the channel tile (testing / tuning hook).
    """
    shp = x.shape
    B, C = shp[0], shp[1]
    L = 1
    for d in shp[2:]:
        L *= d

    # Keep HBM-side dtype of x/out untouched (bf16 stays bf16 -> half the HBM traffic).
    x3 = x.reshape(B, C, L)
    w2 = weight.reshape(C, 1).astype(jnp.float32)
    b2 = bias.reshape(C, 1).astype(jnp.float32)

    itemsize = jnp.dtype(x.dtype).itemsize
    vmem_cap = _vmem_capacity_bytes()
    # Working-set budget ~half of physical VMEM; compiler limit ~5/8 of it
    # (80 MiB on the 128 MiB chips, 40 MiB on v7x -> headroom preserved).
    c_blk = c_block if c_block is not None else _choose_c_block(C, L, itemsize, vmem_cap // 2)
    vmem_limit = int(max(32 * 1024 * 1024, (vmem_cap * 5) // 8))

    # B is the fastest grid axis -> weight/bias block index is constant across it,
    # so they stay VMEM-resident instead of being re-DMA'd every step.
    grid = (pl.cdiv(C, c_blk), B)

    # TODO(synk): for small L with L % 128 != 0 (e.g. 7x7/14x14 maps) a channels-last
    # (L, C) tile with C on lanes would avoid masked partial stores; needs caller layout.
    out = pl.pallas_call(
        _layernorm_nd_kernel(float(eps), 1.0 / float(L)),
        out_shape=jax.ShapeDtypeStruct((B, C, L), x.dtype),
        grid_spec=pltpu.PrefetchScalarGridSpec(
            num_scalar_prefetch=0,
            grid=grid,
            in_specs=[
                pl.BlockSpec((pl.Squeezed(), c_blk, L), lambda c, b: (b, c, 0)),
                pl.BlockSpec((c_blk, 1), lambda c, b: (c, 0)),
                pl.BlockSpec((c_blk, 1), lambda c, b: (c, 0)),
            ],
            out_specs=pl.BlockSpec((pl.Squeezed(), c_blk, L), lambda c, b: (b, c, 0)),
        ),
        compiler_params=pltpu.CompilerParams(
            dimension_semantics=("parallel", "parallel"),
            vmem_limit_bytes=vmem_limit,
        ),
    )(x3, w2, b2)

    return out.reshape(shp)


def layernorm_nd_ref(x, weight, bias, eps=1e-12):
    """Pure-JAX (f32) reference mirroring the PyTorch forward exactly."""
    shp = x.shape
    x3 = x.reshape(shp[0], shp[1], -1).astype(jnp.float32)
    u = jnp.mean(x3, axis=2, keepdims=True)
    s = jnp.mean((x3 - u) ** 2, axis=2, keepdims=True)
    y = (x3 - u) / jnp.sqrt(s + eps)
    y = weight[:, None].astype(jnp.float32) * y + bias[:, None].astype(jnp.float32)
    return y.reshape(shp)


if __name__ == "__main__":
    key = jax.random.PRNGKey(0)
    k1, k2, k3, k4, k5 = jax.random.split(key, 5)

    # Case 1: f32, canonical small shape; weight/bias match torch.ones/zeros init.
    B, C, H, W = 2, 4, 16, 16
    x = jax.random.normal(k1, (B, C, H, W), dtype=jnp.float32)
    weight = jnp.ones((C,), dtype=jnp.float32)
    bias = jnp.zeros((C,), dtype=jnp.float32)
    out = jax.block_until_ready(layernorm_nd(x, weight, bias))
    ref = layernorm_nd_ref(x, weight, bias)
    assert out.shape == x.shape
    assert jnp.allclose(out, ref, atol=1e-5, rtol=1e-5), "f32 mismatch vs reference"

    # Case 2: bf16 input, L = 196 (non-128-multiple lanes), large mean (cancellation check).
    xb = (jax.random.normal(k2, (2, 12, 14, 14), dtype=jnp.float32) * 2.0 + 3.0)
    xb = xb.astype(jnp.bfloat16)
    wb = jnp.arange(12, dtype=jnp.float32) * 0.1 + 0.5
    bb = jnp.linspace(-1.0, 1.0, 12, dtype=jnp.float32)
    out_b = jax.block_until_ready(layernorm_nd(xb, wb, bb))
    ref_b = layernorm_nd_ref(xb.astype(jnp.float32), wb, bb)
    assert out_b.dtype == jnp.bfloat16
    assert jnp.allclose(out_b.astype(jnp.float32), ref_b, atol=5e-2, rtol=5e-2), "bf16 mismatch"

    # Case 3: partial channel blocks (C=20 with forced c_block=8 -> ragged last block).
    xp = jax.random.normal(k3, (2, 20, 8, 32), dtype=jnp.float32)
    wp = jax.random.normal(k4, (20,), dtype=jnp.float32)
    bp = jax.random.normal(k5, (20,), dtype=jnp.float32)
    out_p = jax.block_until_ready(layernorm_nd(xp, wp, bp, c_block=8))
    ref_p = layernorm_nd_ref(xp, wp, bp)
    assert jnp.allclose(out_p, ref_p, atol=1e-5, rtol=1e-5), "partial-block mismatch"

    print("KERNEL_OK")
</pallas_src>

<mosaic_0001>
module attributes {stable_mosaic.version = 11 : i64} {
  func.func @kernel(%arg0: i32, %arg1: i32, %arg2: memref<1x4x256xf32, #tpu.memory_space<vmem>>, %arg3: memref<4x1xf32, #tpu.memory_space<vmem>>, %arg4: memref<4x1xf32, #tpu.memory_space<vmem>>, %arg5: memref<1x4x256xf32, #tpu.memory_space<vmem>>) attributes {dimension_semantics = [#tpu.dimension_semantics<parallel>, #tpu.dimension_semantics<parallel>], iteration_bounds = array<i64: 1, 2>, scalar_prefetch = 0 : i64, scratch_operands = 0 : i64, tpu.core_type = #tpu.core_type<tc>, window_params = [{transform_indices = @transform_0, window_bounds = array<i64: 1, 4, 256>}, {transform_indices = @transform_1, window_bounds = array<i64: 4, 1>}, {transform_indices = @transform_2, window_bounds = array<i64: 4, 1>}, {transform_indices = @transform_3, window_bounds = array<i64: 1, 4, 256>}]} {
    %c0 = arith.constant 0 : index
    %c0_0 = arith.constant 0 : index
    %c0_1 = arith.constant 0 : index
    %0 = vector.load %arg2[%c0, %c0_0, %c0_1] : memref<1x4x256xf32, #tpu.memory_space<vmem>>, vector<1x4x256xf32>
    %1 = vector.shape_cast %0 : vector<1x4x256xf32> to vector<4x256xf32>
    %cst = arith.constant dense<0.000000e+00> : vector<4xf32>
    %2 = vector.multi_reduction <add>, %1, %cst [1] : vector<4x256xf32> to vector<4xf32>
    %3 = vector.shape_cast %2 : vector<4xf32> to vector<4x1xf32>
    %cst_2 = arith.constant 3.906250e-03 : f32
    %4 = vector.broadcast %cst_2 : f32 to vector<4x1xf32>
    %5 = arith.mulf %3, %4 : vector<4x1xf32>
    %6 = vector.broadcast %5 : vector<4x1xf32> to vector<4x256xf32>
    %7 = arith.subf %1, %6 : vector<4x256xf32>
    %8 = arith.mulf %7, %7 : vector<4x256xf32>
    %cst_3 = arith.constant dense<0.000000e+00> : vector<4xf32>
    %9 = vector.multi_reduction <add>, %8, %cst_3 [1] : vector<4x256xf32> to vector<4xf32>
    %10 = vector.shape_cast %9 : vector<4xf32> to vector<4x1xf32>
    %cst_4 = arith.constant 3.906250e-03 : f32
    %11 = vector.broadcast %cst_4 : f32 to vector<4x1xf32>
    %12 = arith.mulf %10, %11 : vector<4x1xf32>
    %cst_5 = arith.constant 9.99999996E-13 : f32
    %13 = vector.broadcast %cst_5 : f32 to vector<4x1xf32>
    %14 = arith.addf %12, %13 : vector<4x1xf32>
    %15 = math.rsqrt %14 : vector<4x1xf32>
    %c0_6 = arith.constant 0 : index
    %c0_7 = arith.constant 0 : index
    %16 = vector.load %arg3[%c0_6, %c0_7] : memref<4x1xf32, #tpu.memory_space<vmem>>, vector<4x1xf32>
    %17 = arith.mulf %16, %15 : vector<4x1xf32>
    %18 = vector.broadcast %17 : vector<4x1xf32> to vector<4x256xf32>
    %19 = arith.mulf %7, %18 : vector<4x256xf32>
    %c0_8 = arith.constant 0 : index
    %c0_9 = arith.constant 0 : index
    %20 = vector.load %arg4[%c0_8, %c0_9] : memref<4x1xf32, #tpu.memory_space<vmem>>, vector<4x1xf32>
    %21 = vector.broadcast %20 : vector<4x1xf32> to vector<4x256xf32>
    %22 = arith.addf %19, %21 : vector<4x256xf32>
    %c0_10 = arith.constant 0 : index
    %c0_11 = arith.constant 0 : index
    %c0_12 = arith.constant 0 : index
    %23 = vector.load %arg5[%c0_10, %c0_11, %c0_12] : memref<1x4x256xf32, #tpu.memory_space<vmem>>, vector<1x4x256xf32>
    %24 = vector.shape_cast %23 : vector<1x4x256xf32> to vector<4x256xf32>
    %25 = vector.shape_cast %22 : vector<4x256xf32> to vector<1x4x256xf32>
    tpu.vector_store %arg5[%c0_10, %c0_11, %c0_12], %25 {strides = array<i32>} : memref<1x4x256xf32, #tpu.memory_space<vmem>>, vector<1x4x256xf32>,
    return
  }
  func.func @transform_0(%arg0: i32, %arg1: i32) -> (i32, i32, i32) {
    %c0_i32 = arith.constant 0 : i32
    %c0_i32_0 = arith.constant 0 : i32
    return %arg1, %arg0, %c0_i32 : i32, i32, i32
  }
  func.func @transform_1(%arg0: i32, %arg1: i32) -> (i32, i32) {
    %c0_i32 = arith.constant 0 : i32
    %c0_i32_0 = arith.constant 0 : i32
    return %arg0, %c0_i32 : i32, i32
  }
  func.func @transform_2(%arg0: i32, %arg1: i32) -> (i32, i32) {
    %c0_i32 = arith.constant 0 : i32
    %c0_i32_0 = arith.constant 0 : i32
    return %arg0, %c0_i32 : i32, i32
  }
  func.func @transform_3(%arg0: i32, %arg1: i32) -> (i32, i32, i32) {
    %c0_i32 = arith.constant 0 : i32
    %c0_i32_0 = arith.constant 0 : i32
    return %arg1, %arg0, %c0_i32 : i32, i32, i32
  }
}

</mosaic_0001>

<llo_original>
// kernel: tpu_custom_call.1
$region0: #{tpu_custom_call.1}
  #allocation0 [shape = 'u32[]', space=smem, size = 0x4, offset = 0x4, fixed_abs, tag = 'smem constant byte address 0x4 - core index']
  #allocation1 [shape = 'u32[72,128]{1,0:T(1,128)}', space=vmem, size = 0x9000, scoped, tag = 'internal scratch']
  %s0 = inlined_call_operand.hbm [shape: f32[2,4,256], index: 0, kind: input, shape index: {}]
  %s1 = inlined_call_operand.vmem [shape: f32[4,1], index: 1, kind: input, shape index: {}]
  %s2 = inlined_call_operand.vmem [shape: f32[4,1], index: 2, kind: input, shape index: {}]
  %s3 = inlined_call_operand.hbm [shape: f32[2,4,256], index: 3, kind: output, shape index: {}]
  %s4 = sld [smem:[#allocation0]]
  $region49: #{tpu_custom_call.1} parent=0
    _
  %s6 = ssub.s32 1, %s4
  %s7 = scalar_select 0, %s6, %s4
  $region1: #{tpu_custom_call.1} parent=0
    #allocation2 [shape = 'u8[8192]{0}', space=vmem, size = 0x2000, scoped, tag = 'input window, operand 0']
    #allocation3 [shape = 's32[2]{0}', space=sflag, size = 0x8, scoped, tag = 'scoped memory for tpu_custom_call.1']
    #allocation4 [shape = 's32[2]{0}', space=sflag, size = 0x8, scoped, tag = 'scoped memory for tpu_custom_call.1']
    #allocation5 [shape = 'u8[8192]{0}', space=vmem, size = 0x2000, scoped, tag = 'output window, operand 0']
    %8 = vsyncpa [#allocation3], 0
    %s9 = scalar_lea.sflag [#allocation3], 1
    %10 = vsyncpa %s9, 0
    %11 = vsyncpa [#allocation4], 0
    %s12 = scalar_lea.sflag [#allocation4], 1
    %13 = vsyncpa %s12, 0
    loop: start=0, step=1, limit=4
    $region2: #{tpu_custom_call.1} parent=1 // loop_pre_header
      _
    $region3: #{tpu_custom_call.1} parent=1 // loop_header
      %s15 = sphi 0, %s19
      %p16 = scmp.ge.s32.totalorder %s15, 4
      %s22 = sphi 0, %s34
      %s23 = sphi 0, %s30
      %s24 = sphi 0, %s22
      %s25 = sphi 0, %s23
      %s26 = sphi 0, %s24
      %s27 = sphi 0, %s25
      %s39 = sphi 0, %s41
      %s42 = sphi 0, %s39
      %s43 = sphi 0, %s42
      %s59 = sphi 0, %s43
      %s65 = sphi 0, %s67
      %s68 = sphi 0, %s65
      %s69 = sphi 0, %s68
      %s85 = sphi 0, %s69
      %s91 = sphi 0, %s93
      %s94 = sphi 0, %s91
      %s95 = sphi 0, %s94
      %s111 = sphi 0, %s95
      %s119 = sphi 0, %s121
      %s122 = sphi 0, %s119
      %s123 = sphi 0, %s122
      %s139 = sphi 0, %s123
    $region4: #{tpu_custom_call.1} parent=1 // loop_header_branch
      %18 = sbr.rel (%p16) target = $region8
    $region5: #{tpu_custom_call.1} parent=1 // loop_body
      %s20 = ssub.s32 %s15, 1
      %s21 = ssub.s32 %s15, 2
      %s28 = sadd.s32 1, %s23
      %p29 = scmp.ge.s32.totalorder %s28, 2
      %s30 = scalar_select %p29, 0, %s28
      %s31 = sadd.s32 1, %s22
      %s32 = scalar_select %p29, %s31, %s22
      %p33 = scmp.ge.s32.totalorder %s32, 1
      %s34 = scalar_select %p33, 0, %s32
      %s35 = ssub.s32 %s23, %s30
      %s36 = ssub.s32 %s22, %s34
      %s37 = sor.u32 %s35, %s36
      %p38 = scmp.eq.s32.totalorder %s37, 0
      %s40 = sadd.s32 %s39, 1
      %s41 = scalar_select %p38, %s39, %s40
      %p44 = pneg %p38
      %p45 = scmp.eq.s32.totalorder %s15, 1
      %p46 = por %p44, %p45
      %p47 = scmp.ne.s32.totalorder %s39, %s42
      %p48 = scmp.eq.s32.totalorder %s15, 0
      %p49 = por %p47, %p48
      %p50 = scmp.ne.s32.totalorder %s39, %s42
      %p51 = scmp.eq.s32.totalorder %s20, 1
      %p52 = por %p50, %p51
      %p53 = scmp.ne.s32.totalorder %s42, %s43
      %p54 = scmp.eq.s32.totalorder %s20, 0
      %p55 = por %p53, %p54
      %p56 = scmp.ne.s32.totalorder %s42, %s43
      %p57 = scmp.eq.s32.totalorder %s21, 1
      %p58 = por %p56, %p57
      %p60 = scmp.ne.s32.totalorder %s43, %s59
      %p61 = scmp.eq.s32.totalorder %s21, 0
      %p62 = por %p60, %p61
      %s63 = ssub.s32 %s22, %s34
      %p64 = scmp.eq.s32.totalorder %s63, 0
      %s66 = sadd.s32 %s65, 1
      %s67 = scalar_select %p64, %s65, %s66
      %p70 = pneg %p64
      %p71 = scmp.eq.s32.totalorder %s15, 1
      %p72 = por %p70, %p71
      %p73 = scmp.ne.s32.totalorder %s65, %s68
      %p74 = scmp.eq.s32.totalorder %s15, 0
      %p75 = por %p73, %p74
      %p76 = scmp.ne.s32.totalorder %s65, %s68
      %p77 = scmp.eq.s32.totalorder %s20, 1
      %p78 = por %p76, %p77
      %p79 = scmp.ne.s32.totalorder %s68, %s69
      %p80 = scmp.eq.s32.totalorder %s20, 0
      %p81 = por %p79, %p80
      %p82 = scmp.ne.s32.totalorder %s68, %s69
      %p83 = scmp.eq.s32.totalorder %s21, 1
      %p84 = por %p82, %p83
      %p86 = scmp.ne.s32.totalorder %s69, %s85
      %p87 = scmp.eq.s32.totalorder %s21, 0
      %p88 = por %p86, %p87
      %s89 = ssub.s32 %s22, %s34
      %p90 = scmp.eq.s32.totalorder %s89, 0
      %s92 = sadd.s32 %s91, 1
      %s93 = scalar_select %p90, %s91, %s92
      %p96 = pneg %p90
      %p97 = scmp.eq.s32.totalorder %s15, 1
      %p98 = por %p96, %p97
      %p99 = scmp.ne.s32.totalorder %s91, %s94
      %p100 = scmp.eq.s32.totalorder %s15, 0
      %p101 = por %p99, %p100
      %p102 = scmp.ne.s32.totalorder %s91, %s94
      %p103 = scmp.eq.s32.totalorder %s20, 1
      %p104 = por %p102, %p103
      %p105 = scmp.ne.s32.totalorder %s94, %s95
      %p106 = scmp.eq.s32.totalorder %s20, 0
      %p107 = por %p105, %p106
      %p108 = scmp.ne.s32.totalorder %s94, %s95
      %p109 = scmp.eq.s32.totalorder %s21, 1
      %p110 = por %p108, %p109
      %p112 = scmp.ne.s32.totalorder %s95, %s111
      %p113 = scmp.eq.s32.totalorder %s21, 0
      %p114 = por %p112, %p113
      %s115 = ssub.s32 %s23, %s30
      %s116 = ssub.s32 %s22, %s34
      %s117 = sor.u32 %s115, %s116
      %p118 = scmp.eq.s32.totalorder %s117, 0
      %s120 = sadd.s32 %s119, 1
      %s121 = scalar_select %p118, %s119, %s120
      %p124 = pneg %p118
      %p125 = scmp.eq.s32.totalorder %s15, 1
      %p126 = por %p124, %p125
      %p127 = scmp.ne.s32.totalorder %s119, %s122
      %p128 = scmp.eq.s32.totalorder %s15, 0
      %p129 = por %p127, %p128
      %p130 = scmp.ne.s32.totalorder %s119, %s122
      %p131 = scmp.eq.s32.totalorder %s20, 1
      %p132 = por %p130, %p131
      %p133 = scmp.ne.s32.totalorder %s122, %s123
      %p134 = scmp.eq.s32.totalorder %s20, 0
      %p135 = por %p133, %p134
      %p136 = scmp.ne.s32.totalorder %s122, %s123
      %p137 = scmp.eq.s32.totalorder %s21, 1
      %p138 = por %p136, %p137
      %p140 = scmp.ne.s32.totalorder %s123, %s139
      %p141 = scmp.eq.s32.totalorder %s21, 0
      %p142 = por %p140, %p141
      %p143 = scmp.le.s32.totalorder 1, %s15
      %p144 = scmp.lt.s32.totalorder %s15, 3
      %p145 = pnand %p143, %p144
      %p146 = pneg %p145
      // Predicated region
      $region9: #{tpu_custom_call.1} parent=5 // pred_check
        _
      $region10: #{tpu_custom_call.1} parent=5 // pred_check_branch
        %148 = sbr.rel (%p145) target = $region12
      $region11: #{tpu_custom_call.1} parent=5 // pred_region
        %s149 = ssub.s32 %s15, 1
        // Predicated region
        $region13: #{tpu_custom_call.1} parent=11 // pred_check
          %p150 = pneg %p81
        $region14: #{tpu_custom_call.1} parent=11 // pred_check_branch
          %152 = sbr.rel (%p150) target = $region16
        $region15: #{tpu_custom_call.1} parent=11 // pred_region
          %p153 = scmp.lt.s32.totalorder %s24, 0
          %s154 = scalar_select %p153, %s24, 0
          %s155 = smul.addr %s154, 4
          %s156 = scalar_lea.vmem %s1, %s155
        $region16: #{tpu_custom_call.1} parent=11 // pred_fallthru
          _
        // Predicated region
        $region17: #{tpu_custom_call.1} parent=11 // pred_check
          %p157 = pneg %p107
        $region18: #{tpu_custom_call.1} parent=11 // pred_check_branch
          %159 = sbr.rel (%p157) target = $region20
        $region19: #{tpu_custom_call.1} parent=11 // pred_region
          %p160 = scmp.lt.s32.totalorder %s24, 0
          %s161 = scalar_select %p160, %s24, 0
          %s162 = smul.addr %s161, 4
          %s163 = scalar_lea.vmem %s2, %s162
        $region20: #{tpu_custom_call.1} parent=11 // pred_fallthru
          _
      $region12: #{tpu_custom_call.1} parent=5 // pred_fallthru
        _
      %p164 = scmp.lt.s32.totalorder %s15, 2
      // Predicated region
      $region21: #{tpu_custom_call.1} parent=5 // pred_check
        %p165 = pneg %p164
      $region22: #{tpu_custom_call.1} parent=5 // pred_check_branch
        %167 = sbr.rel (%p165) target = $region24
      $region23: #{tpu_custom_call.1} parent=5 // pred_region
        // Predicated region
        $region25: #{tpu_custom_call.1} parent=23 // pred_check
          %p168 = pneg %p49
        $region26: #{tpu_custom_call.1} parent=23 // pred_check_branch
          %170 = sbr.rel (%p168) target = $region28
        $region27: #{tpu_custom_call.1} parent=23 // pred_region
          %s171 = sand.u32 %s39, 1
          %s172 = scalar_lea.sflag [#allocation3], %s171
          %s173 = sand.u32 %s39, 1
          %s174 = smul.addr %s173, 8
          %s175 = scalar_lea.vmem [#allocation2], %s174
          %177 = vsyncadd %s172, 0
          %s178 = smul.addr %s22, 2
          %s179 = smul.addr %s23, 2
          %s180 = sadd.s32 %s178, %s179
          %s181 = smul.addr %s180, 4
          %s182 = scalar_lea.hbm %s0, %s181
          %s184 = sshll.u32 %s182, 4
          %s185 = int_to_ptr.hbm [resolvable:$true] %s184
          %s186 = sshll.u32 %s175, 4
          %s187 = int_to_ptr.vmem [resolvable:$true] %s186
          %189 = dma.hbm_to_vmem [thread:$0]  %s185, 128, %s187, %s172
        $region28: #{tpu_custom_call.1} parent=23 // pred_fallthru
          _
      $region24: #{tpu_custom_call.1} parent=5 // pred_fallthru
        _
      %p190 = scmp.le.s32.totalorder 1, %s15
      %p191 = scmp.lt.s32.totalorder %s15, 3
      %p192 = pnand %p190, %p191
      %p193 = pneg %p192
      // Predicated region
      $region29: #{tpu_custom_call.1} parent=5 // pred_check
        _
      $region30: #{tpu_custom_call.1} parent=5 // pred_check_branch
        %195 = sbr.rel (%p192) target = $region32
      $region31: #{tpu_custom_call.1} parent=5 // pred_region
        %s196 = ssub.s32 %s15, 1
        %s197 = sand.u32 %s42, 1
        %s198 = scalar_lea.sflag [#allocation3], %s197
        %s199 = sand.u32 %s42, 1
        %s200 = smul.addr %s199, 8
        %s201 = scalar_lea.vmem [#allocation2], %s200
        // Predicated region
        $region33: #{tpu_custom_call.1} parent=31 // pred_check
          %p202 = pneg %p55
        $region34: #{tpu_custom_call.1} parent=31 // pred_check_branch
          %204 = sbr.rel (%p202) target = $region36
        $region35: #{tpu_custom_call.1} parent=31 // pred_region
          %206 = dma.done %s198, 128
        $region36: #{tpu_custom_call.1} parent=31 // pred_fallthru
          _
        %s207 = sand.u32 %s42, 1
        %s208 = scalar_lea.sflag [#allocation3], %s207
        %s209 = sand.u32 %s42, 1
        %s210 = smul.addr %s209, 8
        %s211 = scalar_lea.vmem [#allocation2], %s210
        %p212 = pneg %p55
        %p213 = pneg %p52
        %p214 = scmp.lt.s32.totalorder %s24, 0
        %s215 = scalar_select %p214, %s24, 0
        %s216 = smul.addr %s215, 4
        %s217 = scalar_lea.vmem %s1, %s216
        %p218 = pneg %p81
        %p219 = pneg %p78
        %p220 = scmp.lt.s32.totalorder %s24, 0
        %s221 = scalar_select %p220, %s24, 0
        %s222 = smul.addr %s221, 4
        %s223 = scalar_lea.vmem %s2, %s222
        %p224 = pneg %p107
        %p225 = pneg %p104
        %p226 = pneg %p135
        %p227 = pneg %p132
        %s228 = sand.u32 %s122, 1
        %s229 = scalar_lea.sflag [#allocation4], %s228
        %s230 = sand.u32 %s122, 1
        %s231 = smul.addr %s230, 8
        %s232 = scalar_lea.vmem [#allocation5], %s231
        %p233 = scmp.lt.s32.totalorder %s24, 0
        %s234 = scalar_select %p233, %s24, 0
        %s235 = smul.addr %s234, 4
        %s236 = scalar_lea.vmem %s1, %s235
        %p237 = scmp.lt.s32.totalorder %s24, 0
        %s238 = scalar_select %p237, %s24, 0
        %s239 = smul.addr %s238, 4
        %s240 = scalar_lea.vmem %s2, %s239
        %v241 = vld [vmem:[%s201] sm:$0xff]
        %243 = vst [vmem:[#allocation1] ss:$2 sm:$0xff] %v241
        %v244 = vld.sshfl [vmem:[#allocation1] sm:$0xff pattern:$0x75316420]
        %v245 = vld.sshfl [vmem:[#allocation1 + $0x8] sm:$0xff pattern:$0x75316420]
        %vm248 = vcmask 1043456
        %v249 = vsel %vm248, %v244, 0.0
        %v250 = vsel %vm248, %v245, 0.0
        %v251 = vadd.f32 %v249, %v250
        %252 = vadd.xlane.f32.xlu0 %v251
        %v253 = vpop.xlane.xlu0 %252
        %v254 = vmul.f32 %v253, 0.00390625
        %v257 = vunpack.c.l.s4 839922192
        %v258 = vunpack.c.0.s8 %v257
        %v259 = vperm.slane %v254, %v258
        %v261 = vsub.f32 %v241, %v259
        %v262 = vmul.f32 %v261, %v261
        %264 = vst [vmem:[#allocation1] ss:$2 sm:$0xff] %v262
        %v265 = vld.sshfl [vmem:[#allocation1] sm:$0xff pattern:$0x75316420]
        %v266 = vld.sshfl [vmem:[#allocation1 + $0x8] sm:$0xff pattern:$0x75316420]
        %v269 = vsel %vm248, %v265, 0.0
        %v270 = vsel %vm248, %v266, 0.0
        %v271 = vadd.f32 %v269, %v270
        %272 = vadd.xlane.f32.xlu0 %v271
        %v273 = vpop.xlane.xlu0 %272
        %v274 = vmul.f32 %v273, 0.00390625
        %v275 = vadd.f32 %v274, 1e-12
        %v276 = vrsqrt.pop %v275
        %v277 = vmul.f32 %v276, %v275
        %v278 = vmul.f32 %v277, %v276
        %v279 = vmul.f32 0.5, %v278
        %v280 = vsub.f32 1.5, %v279
        %v281 = vmul.f32 %v276, %v280
        %vm282 = vweird.f32 %v275
        %vm283 = vweird.f32 %v276
        %vm284 = vmor %vm282, %vm283
        %v285 = vsel %vm284, %v276, %v281
        %v286 = vld [vmem:[%s236] sm:$0xf]
        %v287 = vmul.f32 %v286, %v285
        %289 = vset.pattern.permute.xlu0 0
        %290 = vperm.xlu0 %289, %v287
        %v291 = vpop.permute.xlu0 %290
        %v293 = vunpack.c.l.s4 839922192
        %v294 = vunpack.c.0.s8 %v293
        %v295 = vperm.slane %v291, %v294
        %v297 = vmul.f32 %v261, %v295
        %v298 = vld [vmem:[%s240] sm:$0xf]
        %300 = vset.pattern.permute.xlu0 0
        %301 = vperm.xlu0 %300, %v298
        %v302 = vpop.permute.xlu0 %301
        %v304 = vunpack.c.l.s4 839922192
        %v305 = vunpack.c.0.s8 %v304
        %v306 = vperm.slane %v302, %v305
        %v308 = vadd.f32 %v297, %v306
        %309 = vst [vmem:[%s232] sm:$0xff] %v308
        %s310 = sand.u32 %s122, 1
        %s311 = scalar_lea.sflag [#allocation4], %s310
        %s312 = sand.u32 %s122, 1
        %s313 = smul.addr %s312, 8
        %s314 = scalar_lea.vmem [#allocation5], %s313
        // Predicated region
        $region37: #{tpu_custom_call.1} parent=31 // pred_check
          %p315 = pneg %p132
        $region38: #{tpu_custom_call.1} parent=31 // pred_check_branch
          %317 = sbr.rel (%p315) target = $region40
        $region39: #{tpu_custom_call.1} parent=31 // pred_region
          %319 = vsyncadd %s311, 0
          %s320 = smul.addr %s24, 2
          %s321 = smul.addr %s25, 2
          %s322 = sadd.s32 %s320, %s321
          %s323 = smul.addr %s322, 4
          %s324 = scalar_lea.hbm %s3, %s323
          %s326 = sshll.u32 %s314, 4
          %s327 = int_to_ptr.vmem [resolvable:$true] %s326
          %s328 = sshll.u32 %s324, 4
          %s329 = int_to_ptr.hbm [resolvable:$true] %s328
          %331 = dma.vmem_to_hbm [thread:$0]  %s327, 128, %s329, %s311
        $region40: #{tpu_custom_call.1} parent=31 // pred_fallthru
          _
      $region32: #{tpu_custom_call.1} parent=5 // pred_fallthru
        _
      %p332 = scmp.le.s32.totalorder 2, %s15
      // Predicated region
      $region41: #{tpu_custom_call.1} parent=5 // pred_check
        %p333 = pneg %p332
      $region42: #{tpu_custom_call.1} parent=5 // pred_check_branch
        %335 = sbr.rel (%p333) target = $region44
      $region43: #{tpu_custom_call.1} parent=5 // pred_region
        %s336 = ssub.s32 %s15, 2
        // Predicated region
        $region45: #{tpu_custom_call.1} parent=43 // pred_check
          %p337 = pneg %p138
        $region46: #{tpu_custom_call.1} parent=43 // pred_check_branch
          %339 = sbr.rel (%p337) target = $region48
        $region47: #{tpu_custom_call.1} parent=43 // pred_region
          %s340 = sand.u32 %s123, 1
          %s341 = scalar_lea.sflag [#allocation4], %s340
          %s342 = sand.u32 %s123, 1
          %s343 = smul.addr %s342, 8
          %s344 = scalar_lea.vmem [#allocation5], %s343
          %346 = dma.done %s341, 128
        $region48: #{tpu_custom_call.1} parent=43 // pred_fallthru
          _
      $region44: #{tpu_custom_call.1} parent=5 // pred_fallthru
        _
    $region6: #{tpu_custom_call.1} parent=1 // loop_footer
      %s19 = sadd.s32 1, %s15
    $region7: #{tpu_custom_call.1} parent=1 // loop_footer_branch
      %14 = sbr.rel target = $region3
    $region8: #{tpu_custom_call.1} parent=1 // loop_exit
      _
    %347 = vsyncpa [#allocation3], 1
    %s348 = scalar_lea.sflag [#allocation3], 1
    %349 = vsyncpa %s348, 1
    %350 = vsyncpa [#allocation4], 1
    %s351 = scalar_lea.sflag [#allocation4], 1
    %352 = vsyncpa %s351, 1

</llo_original>
